<compile_context>
chip_gen: v6e
topology: v6e:2x2x1
jax: 0.10.0
libtpu: 0.0.40
codegen_flags: <defaults>
</compile_context>

<pallas_src>
import jax
import jax.numpy as jnp
from jax.experimental import pallas as pl
from jax.experimental.pallas import tpu as pltpu

# ----------------------------- constants --------------------------------
GAIN = 2.2
READOUT_NOISE = 3.0
BLACK_LEVEL = 99.6
WHITE_LEVEL = float(2 ** 16 - 1)
MU = 488.0386
SIGMA = 3.5994
INV_GAIN = 1.0 / GAIN
INV_SIGMA = 1.0 / SIGMA
# electron_repr(readout_noise / gain) ** 2   (constant term in noise_var)
ER_RN2 = ((READOUT_NOISE / GAIN - BLACK_LEVEL) / GAIN) ** 2

NUM_TIMESTEPS = 10          # small T for the demo
IMAGE_SIZE = 16
CHANNELS = 4
BATCH = 2


# -------------------------- in-kernel helpers ---------------------------
def _electron_repr(x):
    return (x - BLACK_LEVEL) * INV_GAIN


def _digital_repr(x):
    return x * GAIN + BLACK_LEVEL


def _energy_norm(x):
    return (x - MU) * INV_SIGMA


def _energy_denorm(x):
    return jnp.clip(x * SIGMA + MU, 0.0, WHITE_LEVEL)


def _decrease_intensity(x, f, eps):
    """decrease_intensity(x, factor) with pre-drawn standard-normal eps.

    forward() only ever uses factor < 1, so the factor != 1 branch applies."""
    e = _electron_repr(x)
    s = f * e
    nvar = (1.0 - f) * jnp.maximum(s, 0.0) + (1.0 - f * f) * ER_RN2
    return jnp.clip(_digital_repr(s + jnp.sqrt(nvar) * eps), 0.0, WHITE_LEVEL)


# --------------------------- fused kernel --------------------------------
def _make_fused_kernel(w_rows, channels):
    """w_rows: C x C nested list of python floats (synthetic 1x1-conv weights)."""
    C = channels

    def kernel(x_ref, eps_ref, fp_ref, fc_ref, temb_ref, loss_ref,
               xn_scr, recon_scr):
        x = x_ref[...]                  # (B, C, HW)  f32, lane-dense
        fp = fp_ref[...]                # (B, 1, 1)   (t-1)/(T+1)
        fc = fc_ref[...]                # (B, 1, 1)    t   /(T+1)

        inv_n = 1.0 / float(x_ref.shape[0] * x_ref.shape[1] * x_ref.shape[2])

        eps_n = eps_ref[0]              # (B, C, HW) standard-normal draws
        eps_p = eps_ref[1]
        eps_c = eps_ref[2]
        eps_x = eps_ref[3]

        # noise = energy_norm(noise_distr(x, fp)).  (In the torch code the
        # electron_repr(x) result inside noise_distr is discarded, so
        # scaled_data stays in digital units; reproduced faithfully here.)
        scaled = fp * x
        nvar = (1.0 - fp) * jnp.maximum(scaled, 0.0) + (1.0 - fp * fp) * ER_RN2
        noise = _energy_norm(_digital_repr(jnp.sqrt(nvar) * eps_n))

        # x_noisy = q_sample(x, t-1)  (kept in VMEM scratch for per-channel
        # reads by the denoiser);  y = q_sample(x, t)
        xn_scr[...] = _energy_norm(_decrease_intensity(x, fp, eps_p))
        y = _energy_norm(_decrease_intensity(x, fc, eps_c))

        # x_recon = denoise_fn(x_noisy, t-1): synthetic per-pixel channel mix
        # + bias + time embedding, as C*C scalar-weight VPU FMAs (no MXU).
        rows = [xn_scr[:, ci, :] for ci in range(C)]      # each (B, HW)
        for co in range(C):
            acc = rows[0] * w_rows[0][co]
            for ci in range(1, C):
                acc = acc + rows[ci] * w_rows[ci][co]
            recon_scr[:, co, :] = acc + temb_ref[:, co, :]  # (B,HW) + (B,1)

        x_noisy = xn_scr[...]
        x_recon = recon_scr[...]

        # next_step
        xd = _energy_denorm(x_noisy)
        drift = _energy_denorm(x_recon)
        # guard fp == 0 (t == 1): torch divides by zero -> +/-inf, then clips;
        # clamping fp to a tiny value gives the same clipped result w/o NaNs.
        inv_fp = 1.0 / jnp.maximum(fp, 1e-20)
        ns = jnp.clip((xd - drift) * inv_fp, 0.0, WHITE_LEVEL)
        next_step = _energy_norm(_decrease_intensity(ns, fc, eps_x))

        # loss_type='l1': mean|x_recon - noise| + mean|next_step - y|
        total = jnp.sum(jnp.abs(x_recon - noise) + jnp.abs(next_step - y)) * inv_n
        loss_ref[...] = jnp.full((1, 1), total, dtype=jnp.float32)

    return kernel


# ------------------------------ wrapper ----------------------------------
class GaussianDiffusionPallas:
    """Pallas port of GaussianDiffusion.forward (loss_type='l1')."""

    def __init__(self, image_size=IMAGE_SIZE, channels=CHANNELS,
                 timesteps=NUM_TIMESTEPS):
        self.image_size = image_size
        self.channels = channels
        self.num_timesteps = timesteps

        # deterministic synthetic denoise_fn parameters (stand-in for the
        # external nn.Module): per-pixel channel mix + bias + time embedding.
        kw = jax.random.PRNGKey(42)
        w = jax.random.normal(kw, (channels, channels), jnp.float32) * 0.05
        self._w_rows = [[float(v) for v in row] for row in jax.device_get(w)]
        self.bias = jnp.zeros((channels,), jnp.float32)
        self.freqs = 1.0 / (10000.0 ** (
            jnp.arange(channels, dtype=jnp.float32) / channels))

        self._kernel = _make_fused_kernel(self._w_rows, channels)
        self._fwd = jax.jit(self._forward)

    def _forward(self, x, key):
        B, C, H, W = x.shape
        HW = H * W
        t_div = float(self.num_timesteps + 1)

        k_t, k_eps = jax.random.split(key)
        # t ~ randint(1, T+1)  -> values in [1, T]
        t = jax.random.randint(k_t, (B,), 1, self.num_timesteps + 1,
                               dtype=jnp.int32)
        tf = t.astype(jnp.float32)

        # all four standard-normal draws in one RNG op / one HBM array
        eps = jax.random.normal(k_eps, (4, B, C, HW), jnp.float32)

        fp = ((tf - 1.0) / t_div).reshape(B, 1, 1)      # (t-1)/(T+1)
        fc = (tf / t_div).reshape(B, 1, 1)              #  t   /(T+1)
        temb = (self.bias[None, :] +
                0.1 * jnp.sin((tf - 1.0)[:, None] * self.freqs[None, :]))
        temb = temb.reshape(B, C, 1)

        # lane-dense layout: NCHW -> (B, C, H*W) (contiguous, free reshape)
        x_flat = x.reshape(B, C, HW)

        loss = pl.pallas_call(
            self._kernel,
            out_shape=jax.ShapeDtypeStruct((1, 1), jnp.float32),
            scratch_shapes=[pltpu.VMEM((B, C, HW), jnp.float32),   # x_noisy
                            pltpu.VMEM((B, C, HW), jnp.float32)],  # x_recon
        )(x_flat, eps, fp, fc, temb)
        return loss[0, 0]

    def forward(self, x, key):
        B, C, H, W = x.shape
        assert H == self.image_size and W == self.image_size, (
            f"height {H} and width {W} of image must be {self.image_size}")
        return self._fwd(x, key)

    __call__ = forward


# ------------------------------- main ------------------------------------
if __name__ == "__main__":
    key = jax.random.PRNGKey(0)
    k_x, k_fwd = jax.random.split(key)
    # raw sensor-domain image data (digital units around the black level)
    x = (jax.random.uniform(k_x, (BATCH, CHANNELS, IMAGE_SIZE, IMAGE_SIZE),
                            jnp.float32) * 1000.0 + BLACK_LEVEL)

    model = GaussianDiffusionPallas(image_size=IMAGE_SIZE, channels=CHANNELS,
                                    timesteps=NUM_TIMESTEPS)
    loss = model(x, k_fwd)
    jax.block_until_ready(loss)
    print("KERNEL_OK")
</pallas_src>

<mosaic_0001>
module attributes {stable_mosaic.version = 11 : i64} {
  func.func @kernel(%arg0: memref<2x4x256xf32, #tpu.memory_space<vmem>>, %arg1: memref<4x2x4x256xf32, #tpu.memory_space<vmem>>, %arg2: memref<2x1x1xf32, #tpu.memory_space<vmem>>, %arg3: memref<2x1x1xf32, #tpu.memory_space<vmem>>, %arg4: memref<2x4x1xf32, #tpu.memory_space<vmem>>, %arg5: memref<1x1xf32, #tpu.memory_space<vmem>>, %arg6: memref<2x4x256xf32, #tpu.memory_space<vmem>>, %arg7: memref<2x4x256xf32, #tpu.memory_space<vmem>>) attributes {dimension_semantics = [], scalar_prefetch = 0 : i64, scratch_operands = 2 : i64, tpu.core_type = #tpu.core_type<tc>} {
    %c0 = arith.constant 0 : index
    %c0_0 = arith.constant 0 : index
    %c0_1 = arith.constant 0 : index
    %0 = vector.load %arg0[%c0, %c0_0, %c0_1] : memref<2x4x256xf32, #tpu.memory_space<vmem>>, vector<2x4x256xf32>
    %c0_2 = arith.constant 0 : index
    %c0_3 = arith.constant 0 : index
    %c0_4 = arith.constant 0 : index
    %1 = vector.load %arg2[%c0_2, %c0_3, %c0_4] : memref<2x1x1xf32, #tpu.memory_space<vmem>>, vector<2x1x1xf32>
    %c0_5 = arith.constant 0 : index
    %c0_6 = arith.constant 0 : index
    %c0_7 = arith.constant 0 : index
    %2 = vector.load %arg3[%c0_5, %c0_6, %c0_7] : memref<2x1x1xf32, #tpu.memory_space<vmem>>, vector<2x1x1xf32>
    %c0_8 = arith.constant 0 : index
    %c0_9 = arith.constant 0 : index
    %c0_10 = arith.constant 0 : index
    %c0_11 = arith.constant 0 : index
    %3 = vector.load %arg1[%c0_8, %c0_9, %c0_10, %c0_11] : memref<4x2x4x256xf32, #tpu.memory_space<vmem>>, vector<1x2x4x256xf32>
    %4 = vector.shape_cast %3 : vector<1x2x4x256xf32> to vector<2x4x256xf32>
    %c1 = arith.constant 1 : index
    %c0_12 = arith.constant 0 : index
    %c0_13 = arith.constant 0 : index
    %c0_14 = arith.constant 0 : index
    %5 = vector.load %arg1[%c1, %c0_12, %c0_13, %c0_14] : memref<4x2x4x256xf32, #tpu.memory_space<vmem>>, vector<1x2x4x256xf32>
    %6 = vector.shape_cast %5 : vector<1x2x4x256xf32> to vector<2x4x256xf32>
    %c2 = arith.constant 2 : index
    %c0_15 = arith.constant 0 : index
    %c0_16 = arith.constant 0 : index
    %c0_17 = arith.constant 0 : index
    %7 = vector.load %arg1[%c2, %c0_15, %c0_16, %c0_17] : memref<4x2x4x256xf32, #tpu.memory_space<vmem>>, vector<1x2x4x256xf32>
    %8 = vector.shape_cast %7 : vector<1x2x4x256xf32> to vector<2x4x256xf32>
    %c3 = arith.constant 3 : index
    %c0_18 = arith.constant 0 : index
    %c0_19 = arith.constant 0 : index
    %c0_20 = arith.constant 0 : index
    %9 = vector.load %arg1[%c3, %c0_18, %c0_19, %c0_20] : memref<4x2x4x256xf32, #tpu.memory_space<vmem>>, vector<1x2x4x256xf32>
    %10 = vector.shape_cast %9 : vector<1x2x4x256xf32> to vector<2x4x256xf32>
    %11 = vector.broadcast %1 : vector<2x1x1xf32> to vector<2x4x256xf32>
    %12 = arith.mulf %11, %0 : vector<2x4x256xf32>
    %cst = arith.constant 1.000000e+00 : f32
    %13 = vector.broadcast %cst : f32 to vector<2x1x1xf32>
    %14 = arith.subf %13, %1 : vector<2x1x1xf32>
    %cst_21 = arith.constant 0.000000e+00 : f32
    %15 = vector.broadcast %cst_21 : f32 to vector<2x4x256xf32>
    %16 = arith.maximumf %12, %15 : vector<2x4x256xf32>
    %17 = vector.broadcast %14 : vector<2x1x1xf32> to vector<2x4x256xf32>
    %18 = arith.mulf %17, %16 : vector<2x4x256xf32>
    %19 = arith.mulf %1, %1 : vector<2x1x1xf32>
    %cst_22 = arith.constant 1.000000e+00 : f32
    %20 = vector.broadcast %cst_22 : f32 to vector<2x1x1xf32>
    %21 = arith.subf %20, %19 : vector<2x1x1xf32>
    %cst_23 = arith.constant 1993.88086 : f32
    %22 = vector.broadcast %cst_23 : f32 to vector<2x1x1xf32>
    %23 = arith.mulf %21, %22 : vector<2x1x1xf32>
    %24 = vector.broadcast %23 : vector<2x1x1xf32> to vector<2x4x256xf32>
    %25 = arith.addf %18, %24 : vector<2x4x256xf32>
    %26 = math.sqrt %25 : vector<2x4x256xf32>
    %27 = arith.mulf %26, %4 : vector<2x4x256xf32>
    %cst_24 = arith.constant 2.200000e+00 : f32
    %28 = vector.broadcast %cst_24 : f32 to vector<2x4x256xf32>
    %29 = arith.mulf %27, %28 : vector<2x4x256xf32>
    %cst_25 = arith.constant 99.5999984 : f32
    %30 = vector.broadcast %cst_25 : f32 to vector<2x4x256xf32>
    %31 = arith.addf %29, %30 : vector<2x4x256xf32>
    %cst_26 = arith.constant 488.038605 : f32
    %32 = vector.broadcast %cst_26 : f32 to vector<2x4x256xf32>
    %33 = arith.subf %31, %32 : vector<2x4x256xf32>
    %cst_27 = arith.constant 0.277824074 : f32
    %34 = vector.broadcast %cst_27 : f32 to vector<2x4x256xf32>
    %35 = arith.mulf %33, %34 : vector<2x4x256xf32>
    %cst_28 = arith.constant 99.5999984 : f32
    %36 = vector.broadcast %cst_28 : f32 to vector<2x4x256xf32>
    %37 = arith.subf %0, %36 : vector<2x4x256xf32>
    %cst_29 = arith.constant 0.454545468 : f32
    %38 = vector.broadcast %cst_29 : f32 to vector<2x4x256xf32>
    %39 = arith.mulf %37, %38 : vector<2x4x256xf32>
    %40 = vector.broadcast %1 : vector<2x1x1xf32> to vector<2x4x256xf32>
    %41 = arith.mulf %40, %39 : vector<2x4x256xf32>
    %cst_30 = arith.constant 1.000000e+00 : f32
    %42 = vector.broadcast %cst_30 : f32 to vector<2x1x1xf32>
    %43 = arith.subf %42, %1 : vector<2x1x1xf32>
    %cst_31 = arith.constant 0.000000e+00 : f32
    %44 = vector.broadcast %cst_31 : f32 to vector<2x4x256xf32>
    %45 = arith.maximumf %41, %44 : vector<2x4x256xf32>
    %46 = vector.broadcast %43 : vector<2x1x1xf32> to vector<2x4x256xf32>
    %47 = arith.mulf %46, %45 : vector<2x4x256xf32>
    %48 = arith.mulf %1, %1 : vector<2x1x1xf32>
    %cst_32 = arith.constant 1.000000e+00 : f32
    %49 = vector.broadcast %cst_32 : f32 to vector<2x1x1xf32>
    %50 = arith.subf %49, %48 : vector<2x1x1xf32>
    %cst_33 = arith.constant 1993.88086 : f32
    %51 = vector.broadcast %cst_33 : f32 to vector<2x1x1xf32>
    %52 = arith.mulf %50, %51 : vector<2x1x1xf32>
    %53 = vector.broadcast %52 : vector<2x1x1xf32> to vector<2x4x256xf32>
    %54 = arith.addf %47, %53 : vector<2x4x256xf32>
    %55 = math.sqrt %54 : vector<2x4x256xf32>
    %56 = arith.mulf %55, %6 : vector<2x4x256xf32>
    %57 = arith.addf %41, %56 : vector<2x4x256xf32>
    %cst_34 = arith.constant 2.200000e+00 : f32
    %58 = vector.broadcast %cst_34 : f32 to vector<2x4x256xf32>
    %59 = arith.mulf %57, %58 : vector<2x4x256xf32>
    %cst_35 = arith.constant 99.5999984 : f32
    %60 = vector.broadcast %cst_35 : f32 to vector<2x4x256xf32>
    %61 = arith.addf %59, %60 : vector<2x4x256xf32>
    %cst_36 = arith.constant 0.000000e+00 : f32
    %cst_37 = arith.constant 6.553500e+04 : f32
    %62 = vector.broadcast %cst_36 : f32 to vector<2x4x256xf32>
    %63 = arith.maximumf %62, %61 : vector<2x4x256xf32>
    %64 = vector.broadcast %cst_37 : f32 to vector<2x4x256xf32>
    %65 = arith.minimumf %64, %63 : vector<2x4x256xf32>
    %cst_38 = arith.constant 488.038605 : f32
    %66 = vector.broadcast %cst_38 : f32 to vector<2x4x256xf32>
    %67 = arith.subf %65, %66 : vector<2x4x256xf32>
    %cst_39 = arith.constant 0.277824074 : f32
    %68 = vector.broadcast %cst_39 : f32 to vector<2x4x256xf32>
    %69 = arith.mulf %67, %68 : vector<2x4x256xf32>
    %c0_40 = arith.constant 0 : index
    %c0_41 = arith.constant 0 : index
    %c0_42 = arith.constant 0 : index
    %70 = vector.load %arg6[%c0_40, %c0_41, %c0_42] : memref<2x4x256xf32, #tpu.memory_space<vmem>>, vector<2x4x256xf32>
    tpu.vector_store %arg6[%c0_40, %c0_41, %c0_42], %69 {strides = array<i32>} : memref<2x4x256xf32, #tpu.memory_space<vmem>>, vector<2x4x256xf32>,
    %cst_43 = arith.constant 99.5999984 : f32
    %71 = vector.broadcast %cst_43 : f32 to vector<2x4x256xf32>
    %72 = arith.subf %0, %71 : vector<2x4x256xf32>
    %cst_44 = arith.constant 0.454545468 : f32
    %73 = vector.broadcast %cst_44 : f32 to vector<2x4x256xf32>
    %74 = arith.mulf %72, %73 : vector<2x4x256xf32>
    %75 = vector.broadcast %2 : vector<2x1x1xf32> to vector<2x4x256xf32>
    %76 = arith.mulf %75, %74 : vector<2x4x256xf32>
    %cst_45 = arith.constant 1.000000e+00 : f32
    %77 = vector.broadcast %cst_45 : f32 to vector<2x1x1xf32>
    %78 = arith.subf %77, %2 : vector<2x1x1xf32>
    %cst_46 = arith.constant 0.000000e+00 : f32
    %79 = vector.broadcast %cst_46 : f32 to vector<2x4x256xf32>
    %80 = arith.maximumf %76, %79 : vector<2x4x256xf32>
    %81 = vector.broadcast %78 : vector<2x1x1xf32> to vector<2x4x256xf32>
    %82 = arith.mulf %81, %80 : vector<2x4x256xf32>
    %83 = arith.mulf %2, %2 : vector<2x1x1xf32>
    %cst_47 = arith.constant 1.000000e+00 : f32
    %84 = vector.broadcast %cst_47 : f32 to vector<2x1x1xf32>
    %85 = arith.subf %84, %83 : vector<2x1x1xf32>
    %cst_48 = arith.constant 1993.88086 : f32
    %86 = vector.broadcast %cst_48 : f32 to vector<2x1x1xf32>
    %87 = arith.mulf %85, %86 : vector<2x1x1xf32>
    %88 = vector.broadcast %87 : vector<2x1x1xf32> to vector<2x4x256xf32>
    %89 = arith.addf %82, %88 : vector<2x4x256xf32>
    %90 = math.sqrt %89 : vector<2x4x256xf32>
    %91 = arith.mulf %90, %8 : vector<2x4x256xf32>
    %92 = arith.addf %76, %91 : vector<2x4x256xf32>
    %cst_49 = arith.constant 2.200000e+00 : f32
    %93 = vector.broadcast %cst_49 : f32 to vector<2x4x256xf32>
    %94 = arith.mulf %92, %93 : vector<2x4x256xf32>
    %cst_50 = arith.constant 99.5999984 : f32
    %95 = vector.broadcast %cst_50 : f32 to vector<2x4x256xf32>
    %96 = arith.addf %94, %95 : vector<2x4x256xf32>
    %cst_51 = arith.constant 0.000000e+00 : f32
    %cst_52 = arith.constant 6.553500e+04 : f32
    %97 = vector.broadcast %cst_51 : f32 to vector<2x4x256xf32>
    %98 = arith.maximumf %97, %96 : vector<2x4x256xf32>
    %99 = vector.broadcast %cst_52 : f32 to vector<2x4x256xf32>
    %100 = arith.minimumf %99, %98 : vector<2x4x256xf32>
    %cst_53 = arith.constant 488.038605 : f32
    %101 = vector.broadcast %cst_53 : f32 to vector<2x4x256xf32>
    %102 = arith.subf %100, %101 : vector<2x4x256xf32>
    %cst_54 = arith.constant 0.277824074 : f32
    %103 = vector.broadcast %cst_54 : f32 to vector<2x4x256xf32>
    %104 = arith.mulf %102, %103 : vector<2x4x256xf32>
    %c0_55 = arith.constant 0 : index
    %c0_56 = arith.constant 0 : index
    %c0_57 = arith.constant 0 : index
    %105 = vector.load %arg6[%c0_55, %c0_56, %c0_57] : memref<2x4x256xf32, #tpu.memory_space<vmem>>, vector<2x1x256xf32>
    %106 = vector.shape_cast %105 : vector<2x1x256xf32> to vector<2x256xf32>
    %c0_58 = arith.constant 0 : index
    %c1_59 = arith.constant 1 : index
    %c0_60 = arith.constant 0 : index
    %107 = vector.load %arg6[%c0_58, %c1_59, %c0_60] : memref<2x4x256xf32, #tpu.memory_space<vmem>>, vector<2x1x256xf32>
    %108 = vector.shape_cast %107 : vector<2x1x256xf32> to vector<2x256xf32>
    %c0_61 = arith.constant 0 : index
    %c2_62 = arith.constant 2 : index
    %c0_63 = arith.constant 0 : index
    %109 = vector.load %arg6[%c0_61, %c2_62, %c0_63] : memref<2x4x256xf32, #tpu.memory_space<vmem>>, vector<2x1x256xf32>
    %110 = vector.shape_cast %109 : vector<2x1x256xf32> to vector<2x256xf32>
    %c0_64 = arith.constant 0 : index
    %c3_65 = arith.constant 3 : index
    %c0_66 = arith.constant 0 : index
    %111 = vector.load %arg6[%c0_64, %c3_65, %c0_66] : memref<2x4x256xf32, #tpu.memory_space<vmem>>, vector<2x1x256xf32>
    %112 = vector.shape_cast %111 : vector<2x1x256xf32> to vector<2x256xf32>
    %cst_67 = arith.constant -0.0014152308 : f32
    %113 = vector.broadcast %cst_67 : f32 to vector<2x256xf32>
    %114 = arith.mulf %106, %113 : vector<2x256xf32>
    %cst_68 = arith.constant -0.00620164117 : f32
    %115 = vector.broadcast %cst_68 : f32 to vector<2x256xf32>
    %116 = arith.mulf %108, %115 : vector<2x256xf32>
    %117 = arith.addf %114, %116 : vector<2x256xf32>
    %cst_69 = arith.constant 0.0260704812 : f32
    %118 = vector.broadcast %cst_69 : f32 to vector<2x256xf32>
    %119 = arith.mulf %110, %118 : vector<2x256xf32>
    %120 = arith.addf %117, %119 : vector<2x256xf32>
    %cst_70 = arith.constant 0.0722893104 : f32
    %121 = vector.broadcast %cst_70 : f32 to vector<2x256xf32>
    %122 = arith.mulf %112, %121 : vector<2x256xf32>
    %123 = arith.addf %120, %122 : vector<2x256xf32>
    %c0_71 = arith.constant 0 : index
    %c0_72 = arith.constant 0 : index
    %c0_73 = arith.constant 0 : index
    %124 = vector.load %arg4[%c0_71, %c0_72, %c0_73] : memref<2x4x1xf32, #tpu.memory_space<vmem>>, vector<2x1x1xf32>
    %125 = vector.shape_cast %124 : vector<2x1x1xf32> to vector<2x1xf32>
    %126 = vector.broadcast %125 : vector<2x1xf32> to vector<2x256xf32>
    %127 = arith.addf %123, %126 : vector<2x256xf32>
    %c0_74 = arith.constant 0 : index
    %c0_75 = arith.constant 0 : index
    %c0_76 = arith.constant 0 : index
    %128 = vector.load %arg7[%c0_74, %c0_75, %c0_76] : memref<2x4x256xf32, #tpu.memory_space<vmem>>, vector<2x1x256xf32>
    %129 = vector.shape_cast %128 : vector<2x1x256xf32> to vector<2x256xf32>
    %130 = vector.shape_cast %127 : vector<2x256xf32> to vector<2x1x256xf32>
    tpu.vector_store %arg7[%c0_74, %c0_75, %c0_76], %130 {strides = array<i32>} : memref<2x4x256xf32, #tpu.memory_space<vmem>>, vector<2x1x256xf32>,
    %cst_77 = arith.constant 0.0233565923 : f32
    %131 = vector.broadcast %cst_77 : f32 to vector<2x256xf32>
    %132 = arith.mulf %106, %131 : vector<2x256xf32>
    %cst_78 = arith.constant 0.0108461576 : f32
    %133 = vector.broadcast %cst_78 : f32 to vector<2x256xf32>
    %134 = arith.mulf %108, %133 : vector<2x256xf32>
    %135 = arith.addf %132, %134 : vector<2x256xf32>
    %cst_79 = arith.constant 0.0455085188 : f32
    %136 = vector.broadcast %cst_79 : f32 to vector<2x256xf32>
    %137 = arith.mulf %110, %136 : vector<2x256xf32>
    %138 = arith.addf %135, %137 : vector<2x256xf32>
    %cst_80 = arith.constant 0.0540453307 : f32
    %139 = vector.broadcast %cst_80 : f32 to vector<2x256xf32>
    %140 = arith.mulf %112, %139 : vector<2x256xf32>
    %141 = arith.addf %138, %140 : vector<2x256xf32>
    %c0_81 = arith.constant 0 : index
    %c1_82 = arith.constant 1 : index
    %c0_83 = arith.constant 0 : index
    %142 = vector.load %arg4[%c0_81, %c1_82, %c0_83] : memref<2x4x1xf32, #tpu.memory_space<vmem>>, vector<2x1x1xf32>
    %143 = vector.shape_cast %142 : vector<2x1x1xf32> to vector<2x1xf32>
    %144 = vector.broadcast %143 : vector<2x1xf32> to vector<2x256xf32>
    %145 = arith.addf %141, %144 : vector<2x256xf32>
    %c0_84 = arith.constant 0 : index
    %c1_85 = arith.constant 1 : index
    %c0_86 = arith.constant 0 : index
    %146 = vector.load %arg7[%c0_84, %c1_85, %c0_86] : memref<2x4x256xf32, #tpu.memory_space<vmem>>, vector<2x1x256xf32>
    %147 = vector.shape_cast %146 : vector<2x1x256xf32> to vector<2x256xf32>
    %148 = vector.shape_cast %145 : vector<2x256xf32> to vector<2x1x256xf32>
    tpu.vector_store %arg7[%c0_84, %c1_85, %c0_86], %148 {strides = array<i32>} : memref<2x4x256xf32, #tpu.memory_space<vmem>>, vector<2x1x256xf32>,
    %cst_87 = arith.constant 0.0147851482 : f32
    %149 = vector.broadcast %cst_87 : f32 to vector<2x256xf32>
    %150 = arith.mulf %106, %149 : vector<2x256xf32>
    %cst_88 = arith.constant -0.0720439479 : f32
    %151 = vector.broadcast %cst_88 : f32 to vector<2x256xf32>
    %152 = arith.mulf %108, %151 : vector<2x256xf32>
    %153 = arith.addf %150, %152 : vector<2x256xf32>
    %cst_89 = arith.constant -0.01922483 : f32
    %154 = vector.broadcast %cst_89 : f32 to vector<2x256xf32>
    %155 = arith.mulf %110, %154 : vector<2x256xf32>
    %156 = arith.addf %153, %155 : vector<2x256xf32>
    %cst_90 = arith.constant -0.00281466055 : f32
    %157 = vector.broadcast %cst_90 : f32 to vector<2x256xf32>
    %158 = arith.mulf %112, %157 : vector<2x256xf32>
    %159 = arith.addf %156, %158 : vector<2x256xf32>
    %c0_91 = arith.constant 0 : index
    %c2_92 = arith.constant 2 : index
    %c0_93 = arith.constant 0 : index
    %160 = vector.load %arg4[%c0_91, %c2_92, %c0_93] : memref<2x4x1xf32, #tpu.memory_space<vmem>>, vector<2x1x1xf32>
    %161 = vector.shape_cast %160 : vector<2x1x1xf32> to vector<2x1xf32>
    %162 = vector.broadcast %161 : vector<2x1xf32> to vector<2x256xf32>
    %163 = arith.addf %159, %162 : vector<2x256xf32>
    %c0_94 = arith.constant 0 : index
    %c2_95 = arith.constant 2 : index
    %c0_96 = arith.constant 0 : index
    %164 = vector.load %arg7[%c0_94, %c2_95, %c0_96] : memref<2x4x256xf32, #tpu.memory_space<vmem>>, vector<2x1x256xf32>
    %165 = vector.shape_cast %164 : vector<2x1x256xf32> to vector<2x256xf32>
    %166 = vector.shape_cast %163 : vector<2x256xf32> to vector<2x1x256xf32>
    tpu.vector_store %arg7[%c0_94, %c2_95, %c0_96], %166 {strides = array<i32>} : memref<2x4x256xf32, #tpu.memory_space<vmem>>, vector<2x1x256xf32>,
    %cst_97 = arith.constant 0.00767729571 : f32
    %167 = vector.broadcast %cst_97 : f32 to vector<2x256xf32>
    %168 = arith.mulf %106, %167 : vector<2x256xf32>
    %cst_98 = arith.constant 0.0377929956 : f32
    %169 = vector.broadcast %cst_98 : f32 to vector<2x256xf32>
    %170 = arith.mulf %108, %169 : vector<2x256xf32>
    %171 = arith.addf %168, %170 : vector<2x256xf32>
    %cst_99 = arith.constant 0.0569911674 : f32
    %172 = vector.broadcast %cst_99 : f32 to vector<2x256xf32>
    %173 = arith.mulf %110, %172 : vector<2x256xf32>
    %174 = arith.addf %171, %173 : vector<2x256xf32>
    %cst_100 = arith.constant 0.045479726 : f32
    %175 = vector.broadcast %cst_100 : f32 to vector<2x256xf32>
    %176 = arith.mulf %112, %175 : vector<2x256xf32>
    %177 = arith.addf %174, %176 : vector<2x256xf32>
    %c0_101 = arith.constant 0 : index
    %c3_102 = arith.constant 3 : index
    %c0_103 = arith.constant 0 : index
    %178 = vector.load %arg4[%c0_101, %c3_102, %c0_103] : memref<2x4x1xf32, #tpu.memory_space<vmem>>, vector<2x1x1xf32>
    %179 = vector.shape_cast %178 : vector<2x1x1xf32> to vector<2x1xf32>
    %180 = vector.broadcast %179 : vector<2x1xf32> to vector<2x256xf32>
    %181 = arith.addf %177, %180 : vector<2x256xf32>
    %c0_104 = arith.constant 0 : index
    %c3_105 = arith.constant 3 : index
    %c0_106 = arith.constant 0 : index
    %182 = vector.load %arg7[%c0_104, %c3_105, %c0_106] : memref<2x4x256xf32, #tpu.memory_space<vmem>>, vector<2x1x256xf32>
    %183 = vector.shape_cast %182 : vector<2x1x256xf32> to vector<2x256xf32>
    %184 = vector.shape_cast %181 : vector<2x256xf32> to vector<2x1x256xf32>
    tpu.vector_store %arg7[%c0_104, %c3_105, %c0_106], %184 {strides = array<i32>} : memref<2x4x256xf32, #tpu.memory_space<vmem>>, vector<2x1x256xf32>,
    %c0_107 = arith.constant 0 : index
    %c0_108 = arith.constant 0 : index
    %c0_109 = arith.constant 0 : index
    %185 = vector.load %arg6[%c0_107, %c0_108, %c0_109] : memref<2x4x256xf32, #tpu.memory_space<vmem>>, vector<2x4x256xf32>
    %c0_110 = arith.constant 0 : index
    %c0_111 = arith.constant 0 : index
    %c0_112 = arith.constant 0 : index
    %186 = vector.load %arg7[%c0_110, %c0_111, %c0_112] : memref<2x4x256xf32, #tpu.memory_space<vmem>>, vector<2x4x256xf32>
    %cst_113 = arith.constant 3.599400e+00 : f32
    %187 = vector.broadcast %cst_113 : f32 to vector<2x4x256xf32>
    %188 = arith.mulf %185, %187 : vector<2x4x256xf32>
    %cst_114 = arith.constant 488.038605 : f32
    %189 = vector.broadcast %cst_114 : f32 to vector<2x4x256xf32>
    %190 = arith.addf %188, %189 : vector<2x4x256xf32>
    %cst_115 = arith.constant 0.000000e+00 : f32
    %cst_116 = arith.constant 6.553500e+04 : f32
    %191 = vector.broadcast %cst_115 : f32 to vector<2x4x256xf32>
    %192 = arith.maximumf %191, %190 : vector<2x4x256xf32>
    %193 = vector.broadcast %cst_116 : f32 to vector<2x4x256xf32>
    %194 = arith.minimumf %193, %192 : vector<2x4x256xf32>
    %cst_117 = arith.constant 3.599400e+00 : f32
    %195 = vector.broadcast %cst_117 : f32 to vector<2x4x256xf32>
    %196 = arith.mulf %186, %195 : vector<2x4x256xf32>
    %cst_118 = arith.constant 488.038605 : f32
    %197 = vector.broadcast %cst_118 : f32 to vector<2x4x256xf32>
    %198 = arith.addf %196, %197 : vector<2x4x256xf32>
    %cst_119 = arith.constant 0.000000e+00 : f32
    %cst_120 = arith.constant 6.553500e+04 : f32
    %199 = vector.broadcast %cst_119 : f32 to vector<2x4x256xf32>
    %200 = arith.maximumf %199, %198 : vector<2x4x256xf32>
    %201 = vector.broadcast %cst_120 : f32 to vector<2x4x256xf32>
    %202 = arith.minimumf %201, %200 : vector<2x4x256xf32>
    %cst_121 = arith.constant 9.99999968E-21 : f32
    %203 = vector.broadcast %cst_121 : f32 to vector<2x1x1xf32>
    %204 = arith.maximumf %1, %203 : vector<2x1x1xf32>
    %cst_122 = arith.constant 1.000000e+00 : f32
    %205 = vector.broadcast %cst_122 : f32 to vector<2x1x1xf32>
    %206 = arith.divf %205, %204 : vector<2x1x1xf32>
    %207 = arith.subf %194, %202 : vector<2x4x256xf32>
    %208 = vector.broadcast %206 : vector<2x1x1xf32> to vector<2x4x256xf32>
    %209 = arith.mulf %207, %208 : vector<2x4x256xf32>
    %cst_123 = arith.constant 0.000000e+00 : f32
    %cst_124 = arith.constant 6.553500e+04 : f32
    %210 = vector.broadcast %cst_123 : f32 to vector<2x4x256xf32>
    %211 = arith.maximumf %210, %209 : vector<2x4x256xf32>
    %212 = vector.broadcast %cst_124 : f32 to vector<2x4x256xf32>
    %213 = arith.minimumf %212, %211 : vector<2x4x256xf32>
    %cst_125 = arith.constant 99.5999984 : f32
    %214 = vector.broadcast %cst_125 : f32 to vector<2x4x256xf32>
    %215 = arith.subf %213, %214 : vector<2x4x256xf32>
    %cst_126 = arith.constant 0.454545468 : f32
    %216 = vector.broadcast %cst_126 : f32 to vector<2x4x256xf32>
    %217 = arith.mulf %215, %216 : vector<2x4x256xf32>
    %218 = vector.broadcast %2 : vector<2x1x1xf32> to vector<2x4x256xf32>
    %219 = arith.mulf %218, %217 : vector<2x4x256xf32>
    %cst_127 = arith.constant 1.000000e+00 : f32
    %220 = vector.broadcast %cst_127 : f32 to vector<2x1x1xf32>
    %221 = arith.subf %220, %2 : vector<2x1x1xf32>
    %cst_128 = arith.constant 0.000000e+00 : f32
    %222 = vector.broadcast %cst_128 : f32 to vector<2x4x256xf32>
    %223 = arith.maximumf %219, %222 : vector<2x4x256xf32>
    %224 = vector.broadcast %221 : vector<2x1x1xf32> to vector<2x4x256xf32>
    %225 = arith.mulf %224, %223 : vector<2x4x256xf32>
    %226 = arith.mulf %2, %2 : vector<2x1x1xf32>
    %cst_129 = arith.constant 1.000000e+00 : f32
    %227 = vector.broadcast %cst_129 : f32 to vector<2x1x1xf32>
    %228 = arith.subf %227, %226 : vector<2x1x1xf32>
    %cst_130 = arith.constant 1993.88086 : f32
    %229 = vector.broadcast %cst_130 : f32 to vector<2x1x1xf32>
    %230 = arith.mulf %228, %229 : vector<2x1x1xf32>
    %231 = vector.broadcast %230 : vector<2x1x1xf32> to vector<2x4x256xf32>
    %232 = arith.addf %225, %231 : vector<2x4x256xf32>
    %233 = math.sqrt %232 : vector<2x4x256xf32>
    %234 = arith.mulf %233, %10 : vector<2x4x256xf32>
    %235 = arith.addf %219, %234 : vector<2x4x256xf32>
    %cst_131 = arith.constant 2.200000e+00 : f32
    %236 = vector.broadcast %cst_131 : f32 to vector<2x4x256xf32>
    %237 = arith.mulf %235, %236 : vector<2x4x256xf32>
    %cst_132 = arith.constant 99.5999984 : f32
    %238 = vector.broadcast %cst_132 : f32 to vector<2x4x256xf32>
    %239 = arith.addf %237, %238 : vector<2x4x256xf32>
    %cst_133 = arith.constant 0.000000e+00 : f32
    %cst_134 = arith.constant 6.553500e+04 : f32
    %240 = vector.broadcast %cst_133 : f32 to vector<2x4x256xf32>
    %241 = arith.maximumf %240, %239 : vector<2x4x256xf32>
    %242 = vector.broadcast %cst_134 : f32 to vector<2x4x256xf32>
    %243 = arith.minimumf %242, %241 : vector<2x4x256xf32>
    %cst_135 = arith.constant 488.038605 : f32
    %244 = vector.broadcast %cst_135 : f32 to vector<2x4x256xf32>
    %245 = arith.subf %243, %244 : vector<2x4x256xf32>
    %cst_136 = arith.constant 0.277824074 : f32
    %246 = vector.broadcast %cst_136 : f32 to vector<2x4x256xf32>
    %247 = arith.mulf %245, %246 : vector<2x4x256xf32>
    %248 = arith.subf %186, %35 : vector<2x4x256xf32>
    %249 = math.absf %248 : vector<2x4x256xf32>
    %250 = arith.subf %247, %104 : vector<2x4x256xf32>
    %251 = math.absf %250 : vector<2x4x256xf32>
    %252 = arith.addf %249, %251 : vector<2x4x256xf32>
    %253 = vector.shape_cast %252 : vector<2x4x256xf32> to vector<1x2x4x256xf32>
    %cst_137 = arith.constant dense<0.000000e+00> : vector<1xf32>
    %254 = vector.multi_reduction <add>, %253, %cst_137 [1, 2, 3] : vector<1x2x4x256xf32> to vector<1xf32>
    %255 = vector.shape_cast %254 : vector<1xf32> to vector<1x1x1x1xf32>
    %256 = vector.extract %255[0, 0, 0, 0] : f32 from vector<1x1x1x1xf32>
    %cst_138 = arith.constant 4.8828125E-4 : f32
    %257 = arith.mulf %256, %cst_138 : f32
    %258 = vector.broadcast %257 : f32 to vector<1x1xf32>
    %c0_139 = arith.constant 0 : index
    %c0_140 = arith.constant 0 : index
    %259 = vector.load %arg5[%c0_139, %c0_140] : memref<1x1xf32, #tpu.memory_space<vmem>>, vector<1x1xf32>
    tpu.vector_store %arg5[%c0_139, %c0_140], %258 {strides = array<i32>} : memref<1x1xf32, #tpu.memory_space<vmem>>, vector<1x1xf32>,
    return
  }
}

</mosaic_0001>

<llo_original>
// kernel: _forward.1
$region0: #{_forward.1}
  #allocation0 [shape = 'u32[]', space=smem, size = 0x4, offset = 0x4, fixed_abs, tag = 'smem constant byte address 0x4 - core index']
  #allocation1 [shape = 'u32[144,128]{1,0:T(1,128)}', space=vmem, size = 0x12000, scoped, tag = 'internal scratch']
  #allocation2 [shape = 'f32[2,4,256]{2,1,0:T(4,128)}', space=vmem, size = 0x2000, scoped, tag = 'scratch operand']
  #allocation3 [shape = 'f32[2,4,256]{2,1,0:T(4,128)}', space=vmem, size = 0x2000, scoped, tag = 'scratch operand']
  %s0 = inlined_call_operand.vmem [shape: f32[2,4,256], index: 0, kind: input, shape index: {}]
  %s1 = inlined_call_operand.vmem [shape: f32[4,2,4,256], index: 1, kind: input, shape index: {}]
  %s2 = inlined_call_operand.vmem [shape: f32[2,1,1], index: 2, kind: input, shape index: {}]
  %s3 = inlined_call_operand.vmem [shape: f32[2,1,1], index: 3, kind: input, shape index: {}]
  %s4 = inlined_call_operand.vmem [shape: f32[2,4,1], index: 4, kind: input, shape index: {}]
  %s5 = inlined_call_operand.hbm [shape: f32[1,1], index: 5, kind: output, shape index: {}]
  %s6 = sld [smem:[#allocation0]]
  $region30: #{_forward.1} parent=0
    _
  %s8 = ssub.s32 1, %s6
  %s9 = scalar_select 0, %s8, %s6
  $region1: #{_forward.1} parent=0
    #allocation4 [shape = 'u8[512]{0}', space=vmem, size = 0x400, scoped, tag = 'output window, operand 0, single buffered']
    #allocation5 [shape = 's32[1]{0}', space=sflag, size = 0x4, scoped, tag = 'scoped memory for _forward.1']
    %10 = vsyncpa [#allocation5], 0
    // Predicated region
    $region2: #{_forward.1} parent=1 // pred_check
      _
    $region3: #{_forward.1} parent=1 // pred_check_branch
      %12 = sbr.rel (0) target = $region5
    $region4: #{_forward.1} parent=1 // pred_region
      _
    $region5: #{_forward.1} parent=1 // pred_fallthru
      _
    // Predicated region
    $region6: #{_forward.1} parent=1 // pred_check
      _
    $region7: #{_forward.1} parent=1 // pred_check_branch
      %14 = sbr.rel (0) target = $region9
    $region8: #{_forward.1} parent=1 // pred_region
      _
    $region9: #{_forward.1} parent=1 // pred_fallthru
      _
    // Predicated region
    $region10: #{_forward.1} parent=1 // pred_check
      _
    $region11: #{_forward.1} parent=1 // pred_check_branch
      %16 = sbr.rel (0) target = $region13
    $region12: #{_forward.1} parent=1 // pred_region
      _
    $region13: #{_forward.1} parent=1 // pred_fallthru
      _
    // Predicated region
    $region14: #{_forward.1} parent=1 // pred_check
      _
    $region15: #{_forward.1} parent=1 // pred_check_branch
      %18 = sbr.rel (0) target = $region17
    $region16: #{_forward.1} parent=1 // pred_region
      _
    $region17: #{_forward.1} parent=1 // pred_fallthru
      _
    // Predicated region
    $region18: #{_forward.1} parent=1 // pred_check
      _
    $region19: #{_forward.1} parent=1 // pred_check_branch
      %20 = sbr.rel (0) target = $region21
    $region20: #{_forward.1} parent=1 // pred_region
      _
    $region21: #{_forward.1} parent=1 // pred_fallthru
      _
    %v21 = vld [vmem:[%s0] sm:$0xff]
    %v22 = vld [vmem:[%s0 + $0x8] sm:$0xff]
    %v23 = vld [vmem:[%s2] sm:$0x1]
    %v24 = vld [vmem:[%s2 + $0x1] sm:$0x1]
    %v25 = vld [vmem:[%s3] sm:$0x1]
    %v26 = vld [vmem:[%s3 + $0x1] sm:$0x1]
    %v27 = vld [vmem:[%s1] sm:$0xff]
    %v28 = vld [vmem:[%s1 + $0x8] sm:$0xff]
    %s29 = scalar_lea.vmem %s1, 16
    %v30 = vld [vmem:[%s29] sm:$0xff]
    %v31 = vld [vmem:[%s29 + $0x8] sm:$0xff]
    %s32 = scalar_lea.vmem %s1, 32
    %v33 = vld [vmem:[%s32] sm:$0xff]
    %v34 = vld [vmem:[%s32 + $0x8] sm:$0xff]
    %s35 = scalar_lea.vmem %s1, 48
    %v36 = vld [vmem:[%s35] sm:$0xff]
    %v37 = vld [vmem:[%s35 + $0x8] sm:$0xff]
    %v40 = vlaneseq
    %v41 = vshrl.u32 %v40, 7
    %v42 = vsub.s32 0, %v41
    %v43 = vrot.slane %v23, %v42
    %v44 = vlaneseq
    %v45 = vshrl.u32 %v44, 7
    %v46 = vsub.s32 0, %v45
    %v47 = vrot.slane %v24, %v46
    %48 = vset.pattern.permute.xlu0 0
    %49 = vperm.xlu0 %48, %v43
    %v50 = vpop.permute.xlu0 %49
    %52 = vset.pattern.permute.xlu0 0
    %53 = vperm.xlu0 %52, %v47
    %v54 = vpop.permute.xlu0 %53
    %v56 = vmul.f32 %v50, %v21
    %v57 = vmul.f32 %v54, %v22
    %v58 = vsub.f32 1.0, %v23
    %v59 = vsub.f32 1.0, %v24
    %v60 = vmax.f32 %v56, 0.0
    %v61 = vmax.f32 %v57, 0.0
    %v64 = vlaneseq
    %v65 = vshrl.u32 %v64, 7
    %v66 = vsub.s32 0, %v65
    %v67 = vrot.slane %v58, %v66
    %v68 = vlaneseq
    %v69 = vshrl.u32 %v68, 7
    %v70 = vsub.s32 0, %v69
    %v71 = vrot.slane %v59, %v70
    %72 = vset.pattern.permute.xlu0 0
    %73 = vperm.xlu0 %72, %v67
    %v74 = vpop.permute.xlu0 %73
    %76 = vset.pattern.permute.xlu0 0
    %77 = vperm.xlu0 %76, %v71
    %v78 = vpop.permute.xlu0 %77
    %v80 = vmul.f32 %v74, %v60
    %v81 = vmul.f32 %v78, %v61
    %v82 = vmul.f32 %v23, %v23
    %v83 = vmul.f32 %v24, %v24
    %v84 = vsub.f32 1.0, %v82
    %v85 = vsub.f32 1.0, %v83
    %v86 = vmul.f32 %v84, 1993.8809
    %v87 = vmul.f32 %v85, 1993.8809
    %v90 = vlaneseq
    %v91 = vshrl.u32 %v90, 7
    %v92 = vsub.s32 0, %v91
    %v93 = vrot.slane %v86, %v92
    %v94 = vlaneseq
    %v95 = vshrl.u32 %v94, 7
    %v96 = vsub.s32 0, %v95
    %v97 = vrot.slane %v87, %v96
    %98 = vset.pattern.permute.xlu0 0
    %99 = vperm.xlu0 %98, %v93
    %v100 = vpop.permute.xlu0 %99
    %102 = vset.pattern.permute.xlu0 0
    %103 = vperm.xlu0 %102, %v97
    %v104 = vpop.permute.xlu0 %103
    %v106 = vadd.f32 %v80, %v100
    %v107 = vadd.f32 %v81, %v104
    %v108 = vrsqrt.pop %v106
    %v109 = vmul.f32 %v106, %v108
    %vm110 = vcmp.eq.f32.partialorder %v106, inf
    %v111 = vsel %vm110, %v106, %v109
    %vm112 = vcmp.eq.f32.partialorder %v106, 0.0
    %v113 = vand.u32 %v106, 2147483648
    %v114 = vsel %vm112, %v113, %v111
    %v115 = vrsqrt.pop %v107
    %v116 = vmul.f32 %v107, %v115
    %vm117 = vcmp.eq.f32.partialorder %v107, inf
    %v118 = vsel %vm117, %v107, %v116
    %vm119 = vcmp.eq.f32.partialorder %v107, 0.0
    %v120 = vand.u32 %v107, 2147483648
    %v121 = vsel %vm119, %v120, %v118
    %v122 = vmul.f32 %v114, %v27
    %v123 = vmul.f32 %v121, %v28
    %v124 = vmul.f32 %v122, 2.2
    %v125 = vmul.f32 %v123, 2.2
    %v126 = vadd.f32 %v124, 99.6
    %v127 = vadd.f32 %v125, 99.6
    %v128 = vsub.f32 %v126, 488.0386
    %v129 = vsub.f32 %v127, 488.0386
    %v130 = vmul.f32 %v128, 0.27782407
    %v131 = vmul.f32 %v129, 0.27782407
    %v132 = vsub.f32 %v21, 99.6
    %v133 = vsub.f32 %v22, 99.6
    %v134 = vmul.f32 %v132, 0.45454547
    %v135 = vmul.f32 %v133, 0.45454547
    %v136 = vmul.f32 %v50, %v134
    %v137 = vmul.f32 %v54, %v135
    %v138 = vmax.f32 %v136, 0.0
    %v139 = vmax.f32 %v137, 0.0
    %v140 = vmul.f32 %v74, %v138
    %v141 = vmul.f32 %v78, %v139
    %v142 = vadd.f32 %v140, %v100
    %v143 = vadd.f32 %v141, %v104
    %v144 = vrsqrt.pop %v142
    %v145 = vmul.f32 %v142, %v144
    %vm146 = vcmp.eq.f32.partialorder %v142, inf
    %v147 = vsel %vm146, %v142, %v145
    %vm148 = vcmp.eq.f32.partialorder %v142, 0.0
    %v149 = vand.u32 %v142, 2147483648
    %v150 = vsel %vm148, %v149, %v147
    %v151 = vrsqrt.pop %v143
    %v152 = vmul.f32 %v143, %v151
    %vm153 = vcmp.eq.f32.partialorder %v143, inf
    %v154 = vsel %vm153, %v143, %v152
    %vm155 = vcmp.eq.f32.partialorder %v143, 0.0
    %v156 = vand.u32 %v143, 2147483648
    %v157 = vsel %vm155, %v156, %v154
    %v158 = vmul.f32 %v150, %v30
    %v159 = vmul.f32 %v157, %v31
    %v160 = vadd.f32 %v136, %v158
    %v161 = vadd.f32 %v137, %v159
    %v162 = vmul.f32 %v160, 2.2
    %v163 = vmul.f32 %v161, 2.2
    %v164 = vadd.f32 %v162, 99.6
    %v165 = vadd.f32 %v163, 99.6
    %v166 = vmax.f32 %v164, 0.0
    %v167 = vmax.f32 %v165, 0.0
    %v168 = vmin.f32 %v166, 65535.0
    %v169 = vmin.f32 %v167, 65535.0
    %v170 = vsub.f32 %v168, 488.0386
    %v171 = vsub.f32 %v169, 488.0386
    %v172 = vmul.f32 %v170, 0.27782407
    %v173 = vmul.f32 %v171, 0.27782407
    %174 = vst [vmem:[#allocation2] sm:$0xff] %v172
    %175 = vst [vmem:[#allocation2 + $0x8] sm:$0xff] %v173
    %v178 = vlaneseq
    %v179 = vshrl.u32 %v178, 7
    %v180 = vsub.s32 0, %v179
    %v181 = vrot.slane %v25, %v180
    %v182 = vlaneseq
    %v183 = vshrl.u32 %v182, 7
    %v184 = vsub.s32 0, %v183
    %v185 = vrot.slane %v26, %v184
    %186 = vset.pattern.permute.xlu0 0
    %187 = vperm.xlu0 %186, %v181
    %v188 = vpop.permute.xlu0 %187
    %190 = vset.pattern.permute.xlu0 0
    %191 = vperm.xlu0 %190, %v185
    %v192 = vpop.permute.xlu0 %191
    %v194 = vmul.f32 %v188, %v134
    %v195 = vmul.f32 %v192, %v135
    %v196 = vsub.f32 1.0, %v25
    %v197 = vsub.f32 1.0, %v26
    %v198 = vmax.f32 %v194, 0.0
    %v199 = vmax.f32 %v195, 0.0
    %v202 = vlaneseq
    %v203 = vshrl.u32 %v202, 7
    %v204 = vsub.s32 0, %v203
    %v205 = vrot.slane %v196, %v204
    %v206 = vlaneseq
    %v207 = vshrl.u32 %v206, 7
    %v208 = vsub.s32 0, %v207
    %v209 = vrot.slane %v197, %v208
    %210 = vset.pattern.permute.xlu0 0
    %211 = vperm.xlu0 %210, %v205
    %v212 = vpop.permute.xlu0 %211
    %214 = vset.pattern.permute.xlu0 0
    %215 = vperm.xlu0 %214, %v209
    %v216 = vpop.permute.xlu0 %215
    %v218 = vmul.f32 %v212, %v198
    %v219 = vmul.f32 %v216, %v199
    %v220 = vmul.f32 %v25, %v25
    %v221 = vmul.f32 %v26, %v26
    %v222 = vsub.f32 1.0, %v220
    %v223 = vsub.f32 1.0, %v221
    %v224 = vmul.f32 %v222, 1993.8809
    %v225 = vmul.f32 %v223, 1993.8809
    %v228 = vlaneseq
    %v229 = vshrl.u32 %v228, 7
    %v230 = vsub.s32 0, %v229
    %v231 = vrot.slane %v224, %v230
    %v232 = vlaneseq
    %v233 = vshrl.u32 %v232, 7
    %v234 = vsub.s32 0, %v233
    %v235 = vrot.slane %v225, %v234
    %236 = vset.pattern.permute.xlu0 0
    %237 = vperm.xlu0 %236, %v231
    %v238 = vpop.permute.xlu0 %237
    %240 = vset.pattern.permute.xlu0 0
    %241 = vperm.xlu0 %240, %v235
    %v242 = vpop.permute.xlu0 %241
    %v244 = vadd.f32 %v218, %v238
    %v245 = vadd.f32 %v219, %v242
    %v246 = vrsqrt.pop %v244
    %v247 = vmul.f32 %v244, %v246
    %vm248 = vcmp.eq.f32.partialorder %v244, inf
    %v249 = vsel %vm248, %v244, %v247
    %vm250 = vcmp.eq.f32.partialorder %v244, 0.0
    %v251 = vand.u32 %v244, 2147483648
    %v252 = vsel %vm250, %v251, %v249
    %v253 = vrsqrt.pop %v245
    %v254 = vmul.f32 %v245, %v253
    %vm255 = vcmp.eq.f32.partialorder %v245, inf
    %v256 = vsel %vm255, %v245, %v254
    %vm257 = vcmp.eq.f32.partialorder %v245, 0.0
    %v258 = vand.u32 %v245, 2147483648
    %v259 = vsel %vm257, %v258, %v256
    %v260 = vmul.f32 %v252, %v33
    %v261 = vmul.f32 %v259, %v34
    %v262 = vadd.f32 %v194, %v260
    %v263 = vadd.f32 %v195, %v261
    %v264 = vmul.f32 %v262, 2.2
    %v265 = vmul.f32 %v263, 2.2
    %v266 = vadd.f32 %v264, 99.6
    %v267 = vadd.f32 %v265, 99.6
    %v268 = vmax.f32 %v266, 0.0
    %v269 = vmax.f32 %v267, 0.0
    %v270 = vmin.f32 %v268, 65535.0
    %v271 = vmin.f32 %v269, 65535.0
    %v272 = vsub.f32 %v270, 488.0386
    %v273 = vsub.f32 %v271, 488.0386
    %v274 = vmul.f32 %v272, 0.27782407
    %v275 = vmul.f32 %v273, 0.27782407
    %v276 = vld [vmem:[#allocation2] ss:$4 sm:$0x3]
    %s277 = scalar_lea.vmem [#allocation2], 8
    %v278 = vld [vmem:[%s277] ss:$4 sm:$0x3]
    %s279 = scalar_lea.vmem [#allocation2], 1
    %v280 = vld [vmem:[%s279] ss:$4 sm:$0x3]
    %s281 = scalar_lea.vmem [#allocation2], 9
    %v282 = vld [vmem:[%s281] ss:$4 sm:$0x3]
    %s283 = scalar_lea.vmem [#allocation2], 2
    %v284 = vld [vmem:[%s283] ss:$4 sm:$0x3]
    %s285 = scalar_lea.vmem [#allocation2], 10
    %v286 = vld [vmem:[%s285] ss:$4 sm:$0x3]
    %s287 = scalar_lea.vmem [#allocation2], 3
    %v288 = vld [vmem:[%s287] ss:$4 sm:$0x3]
    %s289 = scalar_lea.vmem [#allocation2], 11
    %v290 = vld [vmem:[%s289] ss:$4 sm:$0x3]
    %v291 = vmul.f32 %v276, -0.0014152308
    %v292 = vmul.f32 %v278, -0.0014152308
    %v293 = vmul.f32 %v280, -0.006201641
    %v294 = vmul.f32 %v282, -0.006201641
    %v295 = vadd.f32 %v291, %v293
    %v296 = vadd.f32 %v292, %v294
    %v297 = vmul.f32 %v284, 0.026070481
    %v298 = vmul.f32 %v286, 0.026070481
    %v299 = vadd.f32 %v295, %v297
    %v300 = vadd.f32 %v296, %v298
    %v301 = vmul.f32 %v288, 0.07228931
    %v302 = vmul.f32 %v290, 0.07228931
    %v303 = vadd.f32 %v299, %v301
    %v304 = vadd.f32 %v300, %v302
    %v305 = vld [vmem:[%s4] sm:$0x1]
    %v306 = vld [vmem:[%s4 + $0x4] sm:$0x1]
    %308 = vset.pattern.permute.xlu0 0
    %309 = vperm.xlu0 %308, %v305
    %v310 = vpop.permute.xlu0 %309
    %312 = vset.pattern.permute.xlu0 0
    %313 = vperm.xlu0 %312, %v306
    %v314 = vpop.permute.xlu0 %313
    %v315 = vlaneseq
    %v316 = vshrl.u32 %v315, 7
    %v317 = vsub.s32 0, %v316
    %v318 = vrot.slane %v310, %v317
    %v319 = vlaneseq
    %v320 = vshrl.u32 %v319, 7
    %v321 = vsub.s32 0, %v320
    %v322 = vrot.slane %v314, %v321
    %v325 = vadd.f32 %v303, %v318
    %v326 = vadd.f32 %v304, %v322
    %v327 = vlaneseq
    %vm328 = vcmp.ge.s32.totalorder %v327, 0
    %vm329 = vcmp.lt.s32.totalorder %v327, 256
    %vm330 = vmand %vm328, %vm329
    %331 = vst.msk [vmem:[#allocation3] ss:$4 sm:$0x3] %vm330, %v325
    %s332 = scalar_lea.vmem [#allocation3], 8
    %333 = vst.msk [vmem:[%s332] ss:$4 sm:$0x3] %vm330, %v326
    %v334 = vmul.f32 %v276, 0.023356592
    %v335 = vmul.f32 %v278, 0.023356592
    %v336 = vmul.f32 %v280, 0.010846158
    %v337 = vmul.f32 %v282, 0.010846158
    %v338 = vadd.f32 %v334, %v336
    %v339 = vadd.f32 %v335, %v337
    %v340 = vmul.f32 %v284, 0.04550852
    %v341 = vmul.f32 %v286, 0.04550852
    %v342 = vadd.f32 %v338, %v340
    %v343 = vadd.f32 %v339, %v341
    %v344 = vmul.f32 %v288, 0.05404533
    %v345 = vmul.f32 %v290, 0.05404533
    %v346 = vadd.f32 %v342, %v344
    %v347 = vadd.f32 %v343, %v345
    %v348 = vld [vmem:[%s4 + $0x1] sm:$0x1]
    %v349 = vld [vmem:[%s4 + $0x5] sm:$0x1]
    %351 = vset.pattern.permute.xlu0 0
    %352 = vperm.xlu0 %351, %v348
    %v353 = vpop.permute.xlu0 %352
    %355 = vset.pattern.permute.xlu0 0
    %356 = vperm.xlu0 %355, %v349
    %v357 = vpop.permute.xlu0 %356
    %v358 = vlaneseq
    %v359 = vshrl.u32 %v358, 7
    %v360 = vsub.s32 0, %v359
    %v361 = vrot.slane %v353, %v360
    %v362 = vlaneseq
    %v363 = vshrl.u32 %v362, 7
    %v364 = vsub.s32 0, %v363
    %v365 = vrot.slane %v357, %v364
    %v368 = vadd.f32 %v346, %v361
    %v369 = vadd.f32 %v347, %v365
    %s370 = scalar_lea.vmem [#allocation3], 1
    %371 = vst.msk [vmem:[%s370] ss:$4 sm:$0x3] %vm330, %v368
    %s372 = scalar_lea.vmem [#allocation3], 9
    %373 = vst.msk [vmem:[%s372] ss:$4 sm:$0x3] %vm330, %v369
    %v374 = vmul.f32 %v276, 0.014785148
    %v375 = vmul.f32 %v278, 0.014785148
    %v376 = vmul.f32 %v280, -0.07204395
    %v377 = vmul.f32 %v282, -0.07204395
    %v378 = vadd.f32 %v374, %v376
    %v379 = vadd.f32 %v375, %v377
    %v380 = vmul.f32 %v284, -0.01922483
    %v381 = vmul.f32 %v286, -0.01922483
    %v382 = vadd.f32 %v378, %v380
    %v383 = vadd.f32 %v379, %v381
    %v384 = vmul.f32 %v288, -0.0028146605
    %v385 = vmul.f32 %v290, -0.0028146605
    %v386 = vadd.f32 %v382, %v384
    %v387 = vadd.f32 %v383, %v385
    %v388 = vld [vmem:[%s4 + $0x2] sm:$0x1]
    %v389 = vld [vmem:[%s4 + $0x6] sm:$0x1]
    %391 = vset.pattern.permute.xlu0 0
    %392 = vperm.xlu0 %391, %v388
    %v393 = vpop.permute.xlu0 %392
    %395 = vset.pattern.permute.xlu0 0
    %396 = vperm.xlu0 %395, %v389
    %v397 = vpop.permute.xlu0 %396
    %v398 = vlaneseq
    %v399 = vshrl.u32 %v398, 7
    %v400 = vsub.s32 0, %v399
    %v401 = vrot.slane %v393, %v400
    %v402 = vlaneseq
    %v403 = vshrl.u32 %v402, 7
    %v404 = vsub.s32 0, %v403
    %v405 = vrot.slane %v397, %v404
    %v408 = vadd.f32 %v386, %v401
    %v409 = vadd.f32 %v387, %v405
    %s410 = scalar_lea.vmem [#allocation3], 2
    %411 = vst.msk [vmem:[%s410] ss:$4 sm:$0x3] %vm330, %v408
    %s412 = scalar_lea.vmem [#allocation3], 10
    %413 = vst.msk [vmem:[%s412] ss:$4 sm:$0x3] %vm330, %v409
    %v414 = vmul.f32 %v276, 0.0076772957
    %v415 = vmul.f32 %v278, 0.0076772957
    %v416 = vmul.f32 %v280, 0.037792996
    %v417 = vmul.f32 %v282, 0.037792996
    %v418 = vadd.f32 %v414, %v416
    %v419 = vadd.f32 %v415, %v417
    %v420 = vmul.f32 %v284, 0.056991167
    %v421 = vmul.f32 %v286, 0.056991167
    %v422 = vadd.f32 %v418, %v420
    %v423 = vadd.f32 %v419, %v421
    %v424 = vmul.f32 %v288, 0.045479726
    %v425 = vmul.f32 %v290, 0.045479726
    %v426 = vadd.f32 %v422, %v424
    %v427 = vadd.f32 %v423, %v425
    %v428 = vld [vmem:[%s4 + $0x3] sm:$0x1]
    %v429 = vld [vmem:[%s4 + $0x7] sm:$0x1]
    %431 = vset.pattern.permute.xlu0 0
    %432 = vperm.xlu0 %431, %v428
    %v433 = vpop.permute.xlu0 %432
    %435 = vset.pattern.permute.xlu0 0
    %436 = vperm.xlu0 %435, %v429
    %v437 = vpop.permute.xlu0 %436
    %v438 = vlaneseq
    %v439 = vshrl.u32 %v438, 7
    %v440 = vsub.s32 0, %v439
    %v441 = vrot.slane %v433, %v440
    %v442 = vlaneseq
    %v443 = vshrl.u32 %v442, 7
    %v444 = vsub.s32 0, %v443
    %v445 = vrot.slane %v437, %v444
    %v448 = vadd.f32 %v426, %v441
    %v449 = vadd.f32 %v427, %v445
    %s450 = scalar_lea.vmem [#allocation3], 3
    %451 = vst.msk [vmem:[%s450] ss:$4 sm:$0x3] %vm330, %v448
    %s452 = scalar_lea.vmem [#allocation3], 11
    %453 = vst.msk [vmem:[%s452] ss:$4 sm:$0x3] %vm330, %v449
    %v454 = vld [vmem:[#allocation2] sm:$0xff]
    %v455 = vld [vmem:[#allocation2 + $0x8] sm:$0xff]
    %v456 = vld [vmem:[#allocation3] sm:$0xff]
    %v457 = vld [vmem:[#allocation3 + $0x8] sm:$0xff]
    %v458 = vmul.f32 %v454, 3.5994
    %v459 = vmul.f32 %v455, 3.5994
    %v460 = vadd.f32 %v458, 488.0386
    %v461 = vadd.f32 %v459, 488.0386
    %v462 = vmax.f32 %v460, 0.0
    %v463 = vmax.f32 %v461, 0.0
    %v464 = vmin.f32 %v462, 65535.0
    %v465 = vmin.f32 %v463, 65535.0
    %v466 = vmul.f32 %v456, 3.5994
    %v467 = vmul.f32 %v457, 3.5994
    %v468 = vadd.f32 %v466, 488.0386
    %v469 = vadd.f32 %v467, 488.0386
    %v470 = vmax.f32 %v468, 0.0
    %v471 = vmax.f32 %v469, 0.0
    %v472 = vmin.f32 %v470, 65535.0
    %v473 = vmin.f32 %v471, 65535.0
    %v474 = vmax.f32 %v23, 1e-20
    %v475 = vmax.f32 %v24, 1e-20
    %v476 = vrcp.pop %v474
    %v477 = vmul.f32 1.0, %v476
    %v478 = vrcp.pop %v475
    %v479 = vmul.f32 1.0, %v478
    %v480 = vsub.f32 %v464, %v472
    %v481 = vsub.f32 %v465, %v473
    %v484 = vlaneseq
    %v485 = vshrl.u32 %v484, 7
    %v486 = vsub.s32 0, %v485
    %v487 = vrot.slane %v477, %v486
    %v488 = vlaneseq
    %v489 = vshrl.u32 %v488, 7
    %v490 = vsub.s32 0, %v489
    %v491 = vrot.slane %v479, %v490
    %492 = vset.pattern.permute.xlu0 0
    %493 = vperm.xlu0 %492, %v487
    %v494 = vpop.permute.xlu0 %493
    %496 = vset.pattern.permute.xlu0 0
    %497 = vperm.xlu0 %496, %v491
    %v498 = vpop.permute.xlu0 %497
    %v500 = vmul.f32 %v480, %v494
    %v501 = vmul.f32 %v481, %v498
    %v502 = vmax.f32 %v500, 0.0
    %v503 = vmax.f32 %v501, 0.0
    %v504 = vmin.f32 %v502, 65535.0
    %v505 = vmin.f32 %v503, 65535.0
    %v506 = vsub.f32 %v504, 99.6
    %v507 = vsub.f32 %v505, 99.6
    %v508 = vmul.f32 %v506, 0.45454547
    %v509 = vmul.f32 %v507, 0.45454547
    %v510 = vmul.f32 %v188, %v508
    %v511 = vmul.f32 %v192, %v509
    %v512 = vmax.f32 %v510, 0.0
    %v513 = vmax.f32 %v511, 0.0
    %v514 = vmul.f32 %v212, %v512
    %v515 = vmul.f32 %v216, %v513
    %v516 = vadd.f32 %v514, %v238
    %v517 = vadd.f32 %v515, %v242
    %v518 = vrsqrt.pop %v516
    %v519 = vmul.f32 %v516, %v518
    %vm520 = vcmp.eq.f32.partialorder %v516, inf
    %v521 = vsel %vm520, %v516, %v519
    %vm522 = vcmp.eq.f32.partialorder %v516, 0.0
    %v523 = vand.u32 %v516, 2147483648
    %v524 = vsel %vm522, %v523, %v521
    %v525 = vrsqrt.pop %v517
    %v526 = vmul.f32 %v517, %v525
    %vm527 = vcmp.eq.f32.partialorder %v517, inf
    %v528 = vsel %vm527, %v517, %v526
    %vm529 = vcmp.eq.f32.partialorder %v517, 0.0
    %v530 = vand.u32 %v517, 2147483648
    %v531 = vsel %vm529, %v530, %v528
    %v532 = vmul.f32 %v524, %v36
    %v533 = vmul.f32 %v531, %v37
    %v534 = vadd.f32 %v510, %v532
    %v535 = vadd.f32 %v511, %v533
    %v536 = vmul.f32 %v534, 2.2
    %v537 = vmul.f32 %v535, 2.2
    %v538 = vadd.f32 %v536, 99.6
    %v539 = vadd.f32 %v537, 99.6
    %v540 = vmax.f32 %v538, 0.0
    %v541 = vmax.f32 %v539, 0.0
    %v542 = vmin.f32 %v540, 65535.0
    %v543 = vmin.f32 %v541, 65535.0
    %v544 = vsub.f32 %v542, 488.0386
    %v545 = vsub.f32 %v543, 488.0386
    %v546 = vmul.f32 %v544, 0.27782407
    %v547 = vmul.f32 %v545, 0.27782407
    %v548 = vsub.f32 %v456, %v130
    %v549 = vsub.f32 %v457, %v131
    %v550 = vand.u32 2147483647, %v548
    %v551 = vand.u32 2147483647, %v549
    %v552 = vsub.f32 %v546, %v274
    %v553 = vsub.f32 %v547, %v275
    %v554 = vand.u32 2147483647, %v552
    %v555 = vand.u32 2147483647, %v553
    %v556 = vadd.f32 %v550, %v554
    %v557 = vadd.f32 %v551, %v555
    %v560 = vcombine.high %v556, %v556
    %v561 = vcombine.high %v557, %v557
    %vm564 = vcmask 1043456
    %v565 = vsel %vm564, %v556, 0.0
    %v566 = vsel %vm564, %v560, 0.0
    %v567 = vadd.f32 %v565, %v566
    %v568 = vsel %vm564, %v557, 0.0
    %v569 = vadd.f32 %v567, %v568
    %v570 = vsel %vm564, %v561, 0.0
    %v571 = vadd.f32 %v569, %v570
    %572 = vadd.xlane.f32.xlu0 %v571
    %v573 = vpop.xlane.xlu0 %572
    %v574 = vrot.slane %v573, 4
    %v575 = vadd.f32 %v573, %v574
    %v576 = vrot.slane %v575, 2
    %v577 = vadd.f32 %v575, %v576
    %v578 = vrot.slane %v577, 1
    %v579 = vadd.f32 %v577, %v578
    %s580 = vtos %v579
    %s581 = smul.f32 %s580, 0.00048828125
    %v582 = vstv %s581
    %vm583 = vcmask 0
    %584 = vst.msk [vmem:[#allocation4] sm:$0x1] %vm583, %v582
    // Predicated region
    $region22: #{_forward.1} parent=1 // pred_check
      _
    $region23: #{_forward.1} parent=1 // pred_check_branch
      %586 = sbr.rel (0) target = $region25
    $region24: #{_forward.1} parent=1 // pred_region
      %s588 = ssub.s32 16, 16
      %589 = vsyncadd [#allocation5], %s588
      %s591 = sshll.u32 [#allocation4], 4
      %s592 = int_to_ptr.vmem [resolvable:$true] %s591
      %594 = dma.vmem_to_hbm [thread:$0]  %s592, 16, %s5, [#allocation5]
    $region25: #{_forward.1} parent=1 // pred_fallthru
      _
    // Predicated region
    $region26: #{_forward.1} parent=1 // pred_check
      _
    $region27: #{_forward.1} parent=1 // pred_check_branch
      %596 = sbr.rel (0) target = $region29
    $region28: #{_forward.1} parent=1 // pred_region
      %597 = dma.done [#allocation5], 16
    $region29: #{_forward.1} parent=1 // pred_fallthru
      _
    %598 = vsyncpa [#allocation5], 1

</llo_original>
